<compile_context>
chip_gen: v5e
topology: v5e:2x2
jax: 0.10.0
libtpu: 0.0.40
codegen_flags: <defaults>
</compile_context>

<pallas_src>
import functools
import math

import jax
import jax.numpy as jnp
from jax.experimental import pallas as pl
from jax.experimental.pallas import tpu as pltpu

_LANES = 128
_SUBLANES = 8


def _round_up(n, m):
    return ((n + m - 1) // m) * m


def lr_kernel(x_ref, w_ref, b_ref, out_ref):
    """One batch tile: out = x @ W + b (f32 MXU, highest precision, f32 bias add)."""
    acc = jnp.dot(
        x_ref[...],
        w_ref[...],
        preferred_element_type=jnp.float32,
        precision=jax.lax.Precision.HIGHEST,  # PyTorch-f32-faithful matmul
    )
    out_ref[...] = (acc + b_ref[...]).astype(out_ref.dtype)


def prepare_params(w_torch_layout, bias):
    """PyTorch nn.Linear params -> kernel layout (done once).

    weight (n_classes, in_dim) f32 -> (in_dim, n_classes) f32  (MXU-friendly)
    bias   (n_classes,)        f32 -> (1, n_classes)      f32
    No class-dim padding: the kernel writes exactly (B, n_classes).
    """
    w = jnp.transpose(w_torch_layout).astype(jnp.float32)
    b = bias.reshape(1, -1).astype(jnp.float32)
    return w, b


def _choose_batch_tile(B, in_dim, n_classes, max_tile, vmem_budget_bytes):
    """Pick the batch tile from a VMEM byte budget (generation-portable)."""
    b8 = _round_up(max(B, 1), _SUBLANES)
    # VMEM layout pads the last dim to 128 lanes / second-to-last to 8 sublanes.
    in_dim_v = _round_up(in_dim, _LANES)
    nc_v = _round_up(n_classes, _LANES)
    # Per batch row: double-buffered x tile + out tile, f32.
    per_row = 2 * 4 * (in_dim_v + nc_v)
    # Resident (constant-index-map) W and bias, conservatively counted x2.
    resident = 2 * 4 * (_round_up(in_dim, _SUBLANES) * nc_v + _SUBLANES * nc_v)
    avail = max(vmem_budget_bytes - resident, per_row * _SUBLANES)
    tb = min(max_tile, avail // per_row, b8)
    tb = max(_SUBLANES, (tb // _SUBLANES) * _SUBLANES)
    # Keep >= 2 grid steps when the batch allows it so v7x's two TensorCores
    # both get a tile via dimension_semantics=("parallel",). Cheap on 1-TC chips.
    if tb >= b8 and b8 >= 2 * _SUBLANES:
        tb = _round_up(b8 // 2, _SUBLANES)
    return tb


@functools.partial(jax.jit, static_argnames=("batch_tile", "vmem_budget_bytes"))
def lr_model_forward(x, w, b, *, batch_tile=8192, vmem_budget_bytes=24 * 1024 * 1024):
    """Logits: out[i, c] = sum_k x[i, k] * W[k, c] + b[c]; returns (B, n_classes) f32."""
    B, in_dim = x.shape
    in_dim_w, n_classes = w.shape
    assert in_dim == in_dim_w, (in_dim, in_dim_w)

    tb = _choose_batch_tile(B, in_dim, n_classes, batch_tile, vmem_budget_bytes)
    # Ragged last block handled by Pallas (partial reads / clipped writes):
    # no wrapper-side jnp.pad copy of x, no batch-padding rows in the output.
    grid = (pl.cdiv(B, tb),)

    cost = pl.CostEstimate(
        flops=2 * B * in_dim * n_classes,
        transcendentals=0,
        bytes_accessed=(B * in_dim * 4          # x (streamed)
                        + in_dim * n_classes * 4  # W (resident)
                        + n_classes * 4           # bias (resident)
                        + B * n_classes * 4),     # output (streamed, unpadded)
    )

    return pl.pallas_call(
        lr_kernel,
        out_shape=jax.ShapeDtypeStruct((B, n_classes), jnp.float32),
        grid_spec=pltpu.PrefetchScalarGridSpec(
            num_scalar_prefetch=0,
            grid=grid,
            in_specs=[
                pl.BlockSpec((tb, in_dim), lambda i: (i, 0)),          # streamed x tiles
                pl.BlockSpec((in_dim, n_classes), lambda i: (0, 0)),   # VMEM-resident W
                pl.BlockSpec((1, n_classes), lambda i: (0, 0)),        # VMEM-resident bias
            ],
            out_specs=pl.BlockSpec((tb, n_classes), lambda i: (i, 0)),  # exact, unpadded
        ),
        compiler_params=pltpu.CompilerParams(
            dimension_semantics=("parallel",),  # v7x: shard batch tiles across both TCs
        ),
        cost_estimate=cost,
    )(x, w, b)


def lr_model_forward_proba(x, w, b, **kw):
    """Matches LRModel.forward_proba (softmax over kernel logits)."""
    return jax.nn.softmax(lr_model_forward(x, w, b, **kw), axis=1)


def lr_model_forward_labels(x, w, b, **kw):
    """Matches LRModel.forward_labels (argmax over probabilities == argmax logits)."""
    return jnp.argmax(lr_model_forward(x, w, b, **kw), axis=1)


def lr_model_reference(x, w_torch_layout, bias):
    """Pure-JAX f32 reference (PyTorch nn.Linear semantics)."""
    return (jnp.dot(x, jnp.transpose(w_torch_layout),
                    precision=jax.lax.Precision.HIGHEST)
            + bias.reshape(1, -1))


if __name__ == "__main__":
    def run_case(key, batch, in_dim, n_classes, batch_tile=8192):
        kx, kw, kb = jax.random.split(key, 3)
        x = jax.random.normal(kx, (batch, in_dim), jnp.float32)
        bound = 1.0 / math.sqrt(in_dim)
        # PyTorch nn.Linear layout: weight (n_classes, in_dim), bias (n_classes,)
        w = jax.random.uniform(kw, (n_classes, in_dim), jnp.float32, -bound, bound)
        b = jax.random.uniform(kb, (n_classes,), jnp.float32, -bound, bound)

        w_k, b_k = prepare_params(w, b)
        out = lr_model_forward(x, w_k, b_k, batch_tile=batch_tile)
        out = jax.block_until_ready(out)

        ref = lr_model_reference(x, w, b)
        assert out.shape == (batch, n_classes), out.shape
        max_err = float(jnp.max(jnp.abs(out - ref)))
        # HIGHEST-precision f32 MXU vs f32 reference: expected error ~1e-6; the
        # tolerance is loose enough to stay robust across MXU pass counts while
        # still catching any layout / indexing bug (which gives O(1) error).
        assert jnp.allclose(out, ref, atol=1e-2, rtol=1e-2), \
            f"mismatch, max err {max_err}"

    key = jax.random.PRNGKey(0)
    k1, k2 = jax.random.split(key)
    # Standard case: batch split into 2 tiles (v7x dual-TC friendly), unpadded
    # n_classes=10 output (no padded writes, no post-slice copy).
    run_case(k1, batch=512, in_dim=32, n_classes=10)
    # Ragged case: B / in_dim / n_classes not multiples of 8 / 128; exercises the
    # partial last batch block (no jnp.pad anywhere).
    run_case(k2, batch=9, in_dim=20, n_classes=3)

    print("KERNEL_OK")
</pallas_src>

<mosaic_0001>
module attributes {stable_mosaic.version = 11 : i64} {
  func.func @lr_kernel(%arg0: i32, %arg1: memref<256x32xf32, #tpu.memory_space<vmem>>, %arg2: memref<32x10xf32, #tpu.memory_space<vmem>>, %arg3: memref<1x10xf32, #tpu.memory_space<vmem>>, %arg4: memref<256x10xf32, #tpu.memory_space<vmem>>) attributes {dimension_semantics = [#tpu.dimension_semantics<parallel>], iteration_bounds = array<i64: 2>, scalar_prefetch = 0 : i64, scratch_operands = 0 : i64, tpu.core_type = #tpu.core_type<tc>, window_params = [{transform_indices = @transform_0, window_bounds = array<i64: 256, 32>}, {pipeline_mode = #tpu.pipeline_mode<synchronous>, transform_indices = @transform_1, window_bounds = array<i64: 32, 10>}, {pipeline_mode = #tpu.pipeline_mode<synchronous>, transform_indices = @transform_2, window_bounds = array<i64: 1, 10>}, {transform_indices = @transform_3, window_bounds = array<i64: 256, 10>}]} {
    %c0 = arith.constant 0 : index
    %c0_0 = arith.constant 0 : index
    %0 = vector.load %arg1[%c0, %c0_0] : memref<256x32xf32, #tpu.memory_space<vmem>>, vector<256x32xf32>
    %c0_1 = arith.constant 0 : index
    %c0_2 = arith.constant 0 : index
    %1 = vector.load %arg2[%c0_1, %c0_2] : memref<32x10xf32, #tpu.memory_space<vmem>>, vector<32x10xf32>
    %cst = arith.constant dense<0.000000e+00> : vector<256x10xf32>
    %2 = tpu.matmul %0, %1, %cst {dimension_numbers = #tpu.dot_dimension_numbers<[1], [0], [0], [1], [0, 0, 1, 1], [], []>, precision = #tpu.contract_precision<fp32>} : vector<256x32xf32>, vector<32x10xf32>, vector<256x10xf32> -> vector<256x10xf32>
    %c0_3 = arith.constant 0 : index
    %c0_4 = arith.constant 0 : index
    %3 = vector.load %arg3[%c0_3, %c0_4] : memref<1x10xf32, #tpu.memory_space<vmem>>, vector<1x10xf32>
    %4 = vector.broadcast %3 : vector<1x10xf32> to vector<256x10xf32>
    %5 = arith.addf %2, %4 : vector<256x10xf32>
    %c0_5 = arith.constant 0 : index
    %c0_6 = arith.constant 0 : index
    %6 = vector.load %arg4[%c0_5, %c0_6] : memref<256x10xf32, #tpu.memory_space<vmem>>, vector<256x10xf32>
    tpu.vector_store %arg4[%c0_5, %c0_6], %5 {strides = array<i32>} : memref<256x10xf32, #tpu.memory_space<vmem>>, vector<256x10xf32>,
    return
  }
  func.func @transform_0(%arg0: i32) -> (i32, i32) {
    %c0_i32 = arith.constant 0 : i32
    %c0_i32_0 = arith.constant 0 : i32
    return %arg0, %c0_i32 : i32, i32
  }
  func.func @transform_1(%arg0: i32) -> (i32, i32) {
    %c0_i32 = arith.constant 0 : i32
    %c0_i32_0 = arith.constant 0 : i32
    %c0_i32_1 = arith.constant 0 : i32
    return %c0_i32, %c0_i32_0 : i32, i32
  }
  func.func @transform_2(%arg0: i32) -> (i32, i32) {
    %c0_i32 = arith.constant 0 : i32
    %c0_i32_0 = arith.constant 0 : i32
    %c0_i32_1 = arith.constant 0 : i32
    return %c0_i32, %c0_i32_0 : i32, i32
  }
  func.func @transform_3(%arg0: i32) -> (i32, i32) {
    %c0_i32 = arith.constant 0 : i32
    %c0_i32_0 = arith.constant 0 : i32
    return %arg0, %c0_i32 : i32, i32
  }
}

</mosaic_0001>

<llo_original>
// kernel: lr_model_forward.1
$region0: #{lr_model_forward.1}
  #allocation0 [shape = 'u32[]', space=smem, size = 0x4, offset = 0x4, fixed_abs, tag = 'smem constant byte address 0x4 - core index']
  #allocation1 [shape = 'u32[72,128]{1,0:T(1,128)}', space=vmem, size = 0x9000, scoped, tag = 'internal scratch']
  %s0 = inlined_call_operand.vmem [shape: f32[512,32], index: 0, kind: input, shape index: {}]
  %s1 = inlined_call_operand.vmem [shape: f32[32,10], index: 1, kind: input, shape index: {}]
  %s2 = inlined_call_operand.vmem [shape: f32[1,10], index: 2, kind: input, shape index: {}]
  %s3 = inlined_call_operand.vmem [shape: f32[512,10], index: 3, kind: output, shape index: {}]
  %s4 = sld [smem:[#allocation0]]
  $region45: #{lr_model_forward.1} parent=0
    _
  %s6 = ssub.s32 1, %s4
  %s7 = scalar_select 0, %s6, %s4
  loop: start=0, step=1, limit=4
  $region2: #{lr_model_forward.1} parent=0 // loop_pre_header
    _
  $region3: #{lr_model_forward.1} parent=0 // loop_header
    %s9 = sphi 0, %s13
    %p10 = scmp.ge.s32.totalorder %s9, 4
    %s19 = sphi 0, %s21
    %s22 = sphi 0, %s19
    %s23 = sphi 0, %s22
    %s39 = sphi 0, %s23
    %s43 = sphi 0, %s43
    %s45 = sphi 0, %s43
    %s46 = sphi 0, %s45
    %s60 = sphi 0, %s46
    %s64 = sphi 0, %s64
    %s66 = sphi 0, %s64
    %s67 = sphi 0, %s66
    %s81 = sphi 0, %s67
    %s87 = sphi 0, %s89
    %s90 = sphi 0, %s87
    %s91 = sphi 0, %s90
    %s107 = sphi 0, %s91
  $region4: #{lr_model_forward.1} parent=0 // loop_header_branch
    %12 = sbr.rel (%p10) target = $region8
  $region5: #{lr_model_forward.1} parent=0 // loop_body
    %s14 = ssub.s32 %s9, 1
    %s15 = ssub.s32 %s9, 2
    %s16 = sadd.s32 %s9, 1
    %s17 = ssub.s32 %s9, %s16
    %p18 = scmp.eq.s32.totalorder %s17, 0
    %s20 = sadd.s32 %s19, 1
    %s21 = scalar_select %p18, %s19, %s20
    %p24 = pneg %p18
    %p25 = scmp.eq.s32.totalorder %s9, 1
    %p26 = por %p24, %p25
    %p27 = scmp.ne.s32.totalorder %s19, %s22
    %p28 = scmp.eq.s32.totalorder %s9, 0
    %p29 = por %p27, %p28
    %p30 = scmp.ne.s32.totalorder %s19, %s22
    %p31 = scmp.eq.s32.totalorder %s14, 1
    %p32 = por %p30, %p31
    %p33 = scmp.ne.s32.totalorder %s22, %s23
    %p34 = scmp.eq.s32.totalorder %s14, 0
    %p35 = por %p33, %p34
    %p36 = scmp.ne.s32.totalorder %s22, %s23
    %p37 = scmp.eq.s32.totalorder %s15, 1
    %p38 = por %p36, %p37
    %p40 = scmp.ne.s32.totalorder %s23, %s39
    %p41 = scmp.eq.s32.totalorder %s15, 0
    %p42 = por %p40, %p41
    %s44 = sadd.s32 %s43, 1
    %p47 = scmp.eq.s32.totalorder %s9, 1
    %p48 = scmp.ne.s32.totalorder %s43, %s45
    %p49 = scmp.eq.s32.totalorder %s9, 0
    %p50 = por %p48, %p49
    %p51 = scmp.ne.s32.totalorder %s43, %s45
    %p52 = scmp.eq.s32.totalorder %s14, 1
    %p53 = por %p51, %p52
    %p54 = scmp.ne.s32.totalorder %s45, %s46
    %p55 = scmp.eq.s32.totalorder %s14, 0
    %p56 = por %p54, %p55
    %p57 = scmp.ne.s32.totalorder %s45, %s46
    %p58 = scmp.eq.s32.totalorder %s15, 1
    %p59 = por %p57, %p58
    %p61 = scmp.ne.s32.totalorder %s46, %s60
    %p62 = scmp.eq.s32.totalorder %s15, 0
    %p63 = por %p61, %p62
    %s65 = sadd.s32 %s64, 1
    %p68 = scmp.eq.s32.totalorder %s9, 1
    %p69 = scmp.ne.s32.totalorder %s64, %s66
    %p70 = scmp.eq.s32.totalorder %s9, 0
    %p71 = por %p69, %p70
    %p72 = scmp.ne.s32.totalorder %s64, %s66
    %p73 = scmp.eq.s32.totalorder %s14, 1
    %p74 = por %p72, %p73
    %p75 = scmp.ne.s32.totalorder %s66, %s67
    %p76 = scmp.eq.s32.totalorder %s14, 0
    %p77 = por %p75, %p76
    %p78 = scmp.ne.s32.totalorder %s66, %s67
    %p79 = scmp.eq.s32.totalorder %s15, 1
    %p80 = por %p78, %p79
    %p82 = scmp.ne.s32.totalorder %s67, %s81
    %p83 = scmp.eq.s32.totalorder %s15, 0
    %p84 = por %p82, %p83
    %s85 = ssub.s32 %s9, %s16
    %p86 = scmp.eq.s32.totalorder %s85, 0
    %s88 = sadd.s32 %s87, 1
    %s89 = scalar_select %p86, %s87, %s88
    %p92 = pneg %p86
    %p93 = scmp.eq.s32.totalorder %s9, 1
    %p94 = por %p92, %p93
    %p95 = scmp.ne.s32.totalorder %s87, %s90
    %p96 = scmp.eq.s32.totalorder %s9, 0
    %p97 = por %p95, %p96
    %p98 = scmp.ne.s32.totalorder %s87, %s90
    %p99 = scmp.eq.s32.totalorder %s14, 1
    %p100 = por %p98, %p99
    %p101 = scmp.ne.s32.totalorder %s90, %s91
    %p102 = scmp.eq.s32.totalorder %s14, 0
    %p103 = por %p101, %p102
    %p104 = scmp.ne.s32.totalorder %s90, %s91
    %p105 = scmp.eq.s32.totalorder %s15, 1
    %p106 = por %p104, %p105
    %p108 = scmp.ne.s32.totalorder %s91, %s107
    %p109 = scmp.eq.s32.totalorder %s15, 0
    %p110 = por %p108, %p109
    %p111 = scmp.le.s32.totalorder 1, %s9
    %p112 = scmp.lt.s32.totalorder %s9, 3
    %p113 = pnand %p111, %p112
    %p114 = pneg %p113
    // Predicated region
    $region9: #{lr_model_forward.1} parent=5 // pred_check
      _
    $region10: #{lr_model_forward.1} parent=5 // pred_check_branch
      %116 = sbr.rel (%p113) target = $region12
    $region11: #{lr_model_forward.1} parent=5 // pred_region
      %s117 = ssub.s32 %s9, 1
      // Predicated region
      $region13: #{lr_model_forward.1} parent=11 // pred_check
        %p118 = pneg %p56
      $region14: #{lr_model_forward.1} parent=11 // pred_check_branch
        %120 = sbr.rel (%p118) target = $region16
      $region15: #{lr_model_forward.1} parent=11 // pred_region
        _
      $region16: #{lr_model_forward.1} parent=11 // pred_fallthru
        _
      // Predicated region
      $region17: #{lr_model_forward.1} parent=11 // pred_check
        %p121 = pneg %p77
      $region18: #{lr_model_forward.1} parent=11 // pred_check_branch
        %123 = sbr.rel (%p121) target = $region20
      $region19: #{lr_model_forward.1} parent=11 // pred_region
        _
      $region20: #{lr_model_forward.1} parent=11 // pred_fallthru
        _
    $region12: #{lr_model_forward.1} parent=5 // pred_fallthru
      _
    %p124 = scmp.lt.s32.totalorder %s9, 2
    // Predicated region
    $region21: #{lr_model_forward.1} parent=5 // pred_check
      %p125 = pneg %p124
    $region22: #{lr_model_forward.1} parent=5 // pred_check_branch
      %127 = sbr.rel (%p125) target = $region24
    $region23: #{lr_model_forward.1} parent=5 // pred_region
      // Predicated region
      $region25: #{lr_model_forward.1} parent=23 // pred_check
        %p128 = pneg %p29
      $region26: #{lr_model_forward.1} parent=23 // pred_check_branch
        %130 = sbr.rel (%p128) target = $region28
      $region27: #{lr_model_forward.1} parent=23 // pred_region
        %s131 = smul.u32 32, %s9
        %p132 = scmp.lt.s32.totalorder %s131, 63
        %s133 = scalar_select %p132, %s131, 63
        %s134 = smul.addr %s133, 8
        %s135 = scalar_lea.vmem %s0, %s134
        %s136 = smul.u32 32, %s9
      $region28: #{lr_model_forward.1} parent=23 // pred_fallthru
        _
    $region24: #{lr_model_forward.1} parent=5 // pred_fallthru
      _
    %p137 = scmp.le.s32.totalorder 1, %s9
    %p138 = scmp.lt.s32.totalorder %s9, 3
    %p139 = pnand %p137, %p138
    %p140 = pneg %p139
    // Predicated region
    $region29: #{lr_model_forward.1} parent=5 // pred_check
      _
    $region30: #{lr_model_forward.1} parent=5 // pred_check_branch
      %142 = sbr.rel (%p139) target = $region32
    $region31: #{lr_model_forward.1} parent=5 // pred_region
      %s143 = ssub.s32 %s9, 1
      %s144 = smul.u32 32, %s14
      %p145 = scmp.lt.s32.totalorder %s144, 63
      %s146 = scalar_select %p145, %s144, 63
      %s147 = smul.addr %s146, 8
      %s148 = scalar_lea.vmem %s0, %s147
      %p149 = pneg %p35
      %p150 = pneg %p32
      %p151 = pneg %p56
      %p152 = pneg %p53
      %p153 = pneg %p77
      %p154 = pneg %p74
      %p155 = pneg %p103
      %p156 = pneg %p100
      %s157 = smul.u32 32, %s14
      %p158 = scmp.lt.s32.totalorder %s157, 63
      %s159 = scalar_select %p158, %s157, 63
      %s160 = smul.addr %s159, 8
      %s161 = scalar_lea.vmem %s3, %s160
      %s162 = smul.u32 32, %s14
      %p163 = scmp.lt.s32.totalorder %s162, 63
      %s164 = scalar_select %p163, %s162, 63
      %s165 = smul.addr %s164, 8
      %s166 = scalar_lea.vmem %s0, %s165
      %s167 = smul.u32 32, %s14
      %s168 = smul.u32 32, %s14
      %p169 = scmp.lt.s32.totalorder %s168, 63
      %s170 = scalar_select %p169, %s168, 63
      %s171 = smul.addr %s170, 8
      %s172 = scalar_lea.vmem %s3, %s171
      %s173 = smul.u32 32, %s14
      %v174 = vld [vmem:[%s166] sm:$0xff]
      %v175 = vld [vmem:[%s166 + $0x8] sm:$0xff]
      %v176 = vld [vmem:[%s166 + $0x10] sm:$0xff]
      %v177 = vld [vmem:[%s166 + $0x18] sm:$0xff]
      %v178 = vld [vmem:[%s166 + $0x20] sm:$0xff]
      %v179 = vld [vmem:[%s166 + $0x28] sm:$0xff]
      %v180 = vld [vmem:[%s166 + $0x30] sm:$0xff]
      %v181 = vld [vmem:[%s166 + $0x38] sm:$0xff]
      %v182 = vld [vmem:[%s166 + $0x40] sm:$0xff]
      %v183 = vld [vmem:[%s166 + $0x48] sm:$0xff]
      %v184 = vld [vmem:[%s166 + $0x50] sm:$0xff]
      %v185 = vld [vmem:[%s166 + $0x58] sm:$0xff]
      %v186 = vld [vmem:[%s166 + $0x60] sm:$0xff]
      %v187 = vld [vmem:[%s166 + $0x68] sm:$0xff]
      %v188 = vld [vmem:[%s166 + $0x70] sm:$0xff]
      %v189 = vld [vmem:[%s166 + $0x78] sm:$0xff]
      %v190 = vld [vmem:[%s166 + $0x80] sm:$0xff]
      %v191 = vld [vmem:[%s166 + $0x88] sm:$0xff]
      %v192 = vld [vmem:[%s166 + $0x90] sm:$0xff]
      %v193 = vld [vmem:[%s166 + $0x98] sm:$0xff]
      %v194 = vld [vmem:[%s166 + $0xa0] sm:$0xff]
      %v195 = vld [vmem:[%s166 + $0xa8] sm:$0xff]
      %v196 = vld [vmem:[%s166 + $0xb0] sm:$0xff]
      %v197 = vld [vmem:[%s166 + $0xb8] sm:$0xff]
      %v198 = vld [vmem:[%s166 + $0xc0] sm:$0xff]
      %v199 = vld [vmem:[%s166 + $0xc8] sm:$0xff]
      %v200 = vld [vmem:[%s166 + $0xd0] sm:$0xff]
      %v201 = vld [vmem:[%s166 + $0xd8] sm:$0xff]
      %v202 = vld [vmem:[%s166 + $0xe0] sm:$0xff]
      %v203 = vld [vmem:[%s166 + $0xe8] sm:$0xff]
      %v204 = vld [vmem:[%s166 + $0xf0] sm:$0xff]
      %v205 = vld [vmem:[%s166 + $0xf8] sm:$0xff]
      %v206 = vld [vmem:[%s1] sm:$0xff]
      %v207 = vld [vmem:[%s1 + $0x8] sm:$0xff]
      %v208 = vld [vmem:[%s1 + $0x10] sm:$0xff]
      %v209 = vld [vmem:[%s1 + $0x18] sm:$0xff]
      %v210 = vld [vmem:[%s2] sm:$0x1]
      %v212 = vperm.slane %v210, 0
      %vm214 = vcmask 261120
      %v216 = vsel %vm214, %v174, 0
      %v219 = vsel %vm214, %v175, 0
      %v222 = vsel %vm214, %v176, 0
      %v225 = vsel %vm214, %v177, 0
      %v228 = vsel %vm214, %v178, 0
      %v231 = vsel %vm214, %v179, 0
      %v234 = vsel %vm214, %v180, 0
      %v237 = vsel %vm214, %v181, 0
      %v240 = vsel %vm214, %v182, 0
      %v243 = vsel %vm214, %v183, 0
      %v246 = vsel %vm214, %v184, 0
      %v249 = vsel %vm214, %v185, 0
      %v252 = vsel %vm214, %v186, 0
      %v255 = vsel %vm214, %v187, 0
      %v258 = vsel %vm214, %v188, 0
      %v261 = vsel %vm214, %v189, 0
      %v264 = vsel %vm214, %v190, 0
      %v267 = vsel %vm214, %v191, 0
      %v270 = vsel %vm214, %v192, 0
      %v273 = vsel %vm214, %v193, 0
      %v276 = vsel %vm214, %v194, 0
      %v279 = vsel %vm214, %v195, 0
      %v282 = vsel %vm214, %v196, 0
      %v285 = vsel %vm214, %v197, 0
      %v288 = vsel %vm214, %v198, 0
      %v291 = vsel %vm214, %v199, 0
      %v294 = vsel %vm214, %v200, 0
      %v297 = vsel %vm214, %v201, 0
      %v300 = vsel %vm214, %v202, 0
      %v303 = vsel %vm214, %v203, 0
      %v306 = vsel %vm214, %v204, 0
      %v309 = vsel %vm214, %v205, 0
      %311 = vmatpush.msra.mxu0 0.0
      %312 = vmatpush.msra.mxu0 0.0
      %313 = vmatpush.msra.mxu0 0.0
      %314 = vmatpush.msra.mxu0 0.0
      %315 = vmatpush.msra.mxu0 0.0
      %316 = vmatpush.msra.mxu0 0.0
      %317 = vmatpush.msra.mxu0 0.0
      %318 = vmatpush.msra.mxu0 0.0
      %319 = vmatpush.msra.mxu0 0.0
      %320 = vmatpush.msra.mxu0 0.0
      %321 = vmatpush.msra.mxu0 0.0
      %322 = vmatpush.msra.mxu0 0.0
      %v323 = vand.u32 %v209, 4294901760
      %324 = vmatpush.msra.mxu0 %v323
      %v325 = vand.u32 %v208, 4294901760
      %326 = vmatpush.msra.mxu0 %v325
      %v327 = vand.u32 %v207, 4294901760
      %328 = vmatpush.msra.mxu0 %v327
      %v329 = vand.u32 %v206, 4294901760
      %330 = vmatpush.msra.mxu0 %v329
      %v331 = vand.u32 %v216, 4294901760
      %v332 = vsub.f32 %v216, %v331
      %v333 = vand.u32 %v332, 4294901760
      %v334 = vsub.f32 %v332, %v333
      %v335 = vand.u32 %v334, 4294901760
      %336 = vmatmul.f32.gmra.mxu0 %v335
      %v337 = vpop.f32.mrf.mxu0
      %v338 = vadd.f32 %v212, %v337
      %v339 = vand.u32 %v219, 4294901760
      %v340 = vsub.f32 %v219, %v339
      %v341 = vand.u32 %v340, 4294901760
      %v342 = vsub.f32 %v340, %v341
      %v343 = vand.u32 %v342, 4294901760
      %344 = vmatmul.f32.gmra.mxu0 %v343
      %v345 = vpop.f32.mrf.mxu0
      %v346 = vadd.f32 %v212, %v345
      %v347 = vand.u32 %v222, 4294901760
      %v348 = vsub.f32 %v222, %v347
      %v349 = vand.u32 %v348, 4294901760
      %v350 = vsub.f32 %v348, %v349
      %v351 = vand.u32 %v350, 4294901760
      %352 = vmatmul.f32.gmra.mxu0 %v351
      %v353 = vpop.f32.mrf.mxu0
      %v354 = vadd.f32 %v212, %v353
      %v355 = vand.u32 %v225, 4294901760
      %v356 = vsub.f32 %v225, %v355
      %v357 = vand.u32 %v356, 4294901760
      %v358 = vsub.f32 %v356, %v357
      %v359 = vand.u32 %v358, 4294901760
      %360 = vmatmul.f32.gmra.mxu0 %v359
      %v361 = vpop.f32.mrf.mxu0
      %v362 = vadd.f32 %v212, %v361
      %v363 = vand.u32 %v228, 4294901760
      %v364 = vsub.f32 %v228, %v363
      %v365 = vand.u32 %v364, 4294901760
      %v366 = vsub.f32 %v364, %v365
      %v367 = vand.u32 %v366, 4294901760
      %368 = vmatmul.f32.gmra.mxu0 %v367
      %v369 = vpop.f32.mrf.mxu0
      %v370 = vadd.f32 %v212, %v369
      %v371 = vand.u32 %v231, 4294901760
      %v372 = vsub.f32 %v231, %v371
      %v373 = vand.u32 %v372, 4294901760
      %v374 = vsub.f32 %v372, %v373
      %v375 = vand.u32 %v374, 4294901760
      %376 = vmatmul.f32.gmra.mxu0 %v375
      %v377 = vpop.f32.mrf.mxu0
      %v378 = vadd.f32 %v212, %v377
      %v379 = vand.u32 %v234, 4294901760
      %v380 = vsub.f32 %v234, %v379
      %v381 = vand.u32 %v380, 4294901760
      %v382 = vsub.f32 %v380, %v381
      %v383 = vand.u32 %v382, 4294901760
      %384 = vmatmul.f32.gmra.mxu0 %v383
      %v385 = vpop.f32.mrf.mxu0
      %v386 = vadd.f32 %v212, %v385
      %v387 = vand.u32 %v237, 4294901760
      %v388 = vsub.f32 %v237, %v387
      %v389 = vand.u32 %v388, 4294901760
      %v390 = vsub.f32 %v388, %v389
      %v391 = vand.u32 %v390, 4294901760
      %392 = vmatmul.f32.gmra.mxu0 %v391
      %v393 = vpop.f32.mrf.mxu0
      %v394 = vadd.f32 %v212, %v393
      %v395 = vand.u32 %v240, 4294901760
      %v396 = vsub.f32 %v240, %v395
      %v397 = vand.u32 %v396, 4294901760
      %v398 = vsub.f32 %v396, %v397
      %v399 = vand.u32 %v398, 4294901760
      %400 = vmatmul.f32.gmra.mxu0 %v399
      %v401 = vpop.f32.mrf.mxu0
      %v402 = vadd.f32 %v212, %v401
      %v403 = vand.u32 %v243, 4294901760
      %v404 = vsub.f32 %v243, %v403
      %v405 = vand.u32 %v404, 4294901760
      %v406 = vsub.f32 %v404, %v405
      %v407 = vand.u32 %v406, 4294901760
      %408 = vmatmul.f32.gmra.mxu0 %v407
      %v409 = vpop.f32.mrf.mxu0
      %v410 = vadd.f32 %v212, %v409
      %v411 = vand.u32 %v246, 4294901760
      %v412 = vsub.f32 %v246, %v411
      %v413 = vand.u32 %v412, 4294901760
      %v414 = vsub.f32 %v412, %v413
      %v415 = vand.u32 %v414, 4294901760
      %416 = vmatmul.f32.gmra.mxu0 %v415
      %v417 = vpop.f32.mrf.mxu0
      %v418 = vadd.f32 %v212, %v417
      %v419 = vand.u32 %v249, 4294901760
      %v420 = vsub.f32 %v249, %v419
      %v421 = vand.u32 %v420, 4294901760
      %v422 = vsub.f32 %v420, %v421
      %v423 = vand.u32 %v422, 4294901760
      %424 = vmatmul.f32.gmra.mxu0 %v423
      %v425 = vpop.f32.mrf.mxu0
      %v426 = vadd.f32 %v212, %v425
      %v427 = vand.u32 %v252, 4294901760
      %v428 = vsub.f32 %v252, %v427
      %v429 = vand.u32 %v428, 4294901760
      %v430 = vsub.f32 %v428, %v429
      %v431 = vand.u32 %v430, 4294901760
      %432 = vmatmul.f32.gmra.mxu0 %v431
      %v433 = vpop.f32.mrf.mxu0
      %v434 = vadd.f32 %v212, %v433
      %v435 = vand.u32 %v255, 4294901760
      %v436 = vsub.f32 %v255, %v435
      %v437 = vand.u32 %v436, 4294901760
      %v438 = vsub.f32 %v436, %v437
      %v439 = vand.u32 %v438, 4294901760
      %440 = vmatmul.f32.gmra.mxu0 %v439
      %v441 = vpop.f32.mrf.mxu0
      %v442 = vadd.f32 %v212, %v441
      %v443 = vand.u32 %v258, 4294901760
      %v444 = vsub.f32 %v258, %v443
      %v445 = vand.u32 %v444, 4294901760
      %v446 = vsub.f32 %v444, %v445
      %v447 = vand.u32 %v446, 4294901760
      %448 = vmatmul.f32.gmra.mxu0 %v447
      %v449 = vpop.f32.mrf.mxu0
      %v450 = vadd.f32 %v212, %v449
      %v451 = vand.u32 %v261, 4294901760
      %v452 = vsub.f32 %v261, %v451
      %v453 = vand.u32 %v452, 4294901760
      %v454 = vsub.f32 %v452, %v453
      %v455 = vand.u32 %v454, 4294901760
      %456 = vmatmul.f32.gmra.mxu0 %v455
      %v457 = vpop.f32.mrf.mxu0
      %v458 = vadd.f32 %v212, %v457
      %v459 = vand.u32 %v264, 4294901760
      %v460 = vsub.f32 %v264, %v459
      %v461 = vand.u32 %v460, 4294901760
      %v462 = vsub.f32 %v460, %v461
      %v463 = vand.u32 %v462, 4294901760
      %464 = vmatmul.f32.gmra.mxu0 %v463
      %v465 = vpop.f32.mrf.mxu0
      %v466 = vadd.f32 %v212, %v465
      %v467 = vand.u32 %v267, 4294901760
      %v468 = vsub.f32 %v267, %v467
      %v469 = vand.u32 %v468, 4294901760
      %v470 = vsub.f32 %v468, %v469
      %v471 = vand.u32 %v470, 4294901760
      %472 = vmatmul.f32.gmra.mxu0 %v471
      %v473 = vpop.f32.mrf.mxu0
      %v474 = vadd.f32 %v212, %v473
      %v475 = vand.u32 %v270, 4294901760
      %v476 = vsub.f32 %v270, %v475
      %v477 = vand.u32 %v476, 4294901760
      %v478 = vsub.f32 %v476, %v477
      %v479 = vand.u32 %v478, 4294901760
      %480 = vmatmul.f32.gmra.mxu0 %v479
      %v481 = vpop.f32.mrf.mxu0
      %v482 = vadd.f32 %v212, %v481
      %v483 = vand.u32 %v273, 4294901760
      %v484 = vsub.f32 %v273, %v483
      %v485 = vand.u32 %v484, 4294901760
      %v486 = vsub.f32 %v484, %v485
      %v487 = vand.u32 %v486, 4294901760
      %488 = vmatmul.f32.gmra.mxu0 %v487
      %v489 = vpop.f32.mrf.mxu0
      %v490 = vadd.f32 %v212, %v489
      %v491 = vand.u32 %v276, 4294901760
      %v492 = vsub.f32 %v276, %v491
      %v493 = vand.u32 %v492, 4294901760
      %v494 = vsub.f32 %v492, %v493
      %v495 = vand.u32 %v494, 4294901760
      %496 = vmatmul.f32.gmra.mxu0 %v495
      %v497 = vpop.f32.mrf.mxu0
      %v498 = vadd.f32 %v212, %v497
      %v499 = vand.u32 %v279, 4294901760
      %v500 = vsub.f32 %v279, %v499
      %v501 = vand.u32 %v500, 4294901760
      %v502 = vsub.f32 %v500, %v501
      %v503 = vand.u32 %v502, 4294901760
      %504 = vmatmul.f32.gmra.mxu0 %v503
      %v505 = vpop.f32.mrf.mxu0
      %v506 = vadd.f32 %v212, %v505
      %v507 = vand.u32 %v282, 4294901760
      %v508 = vsub.f32 %v282, %v507
      %v509 = vand.u32 %v508, 4294901760
      %v510 = vsub.f32 %v508, %v509
      %v511 = vand.u32 %v510, 4294901760
      %512 = vmatmul.f32.gmra.mxu0 %v511
      %v513 = vpop.f32.mrf.mxu0
      %v514 = vadd.f32 %v212, %v513
      %v515 = vand.u32 %v285, 4294901760
      %v516 = vsub.f32 %v285, %v515
      %v517 = vand.u32 %v516, 4294901760
      %v518 = vsub.f32 %v516, %v517
      %v519 = vand.u32 %v518, 4294901760
      %520 = vmatmul.f32.gmra.mxu0 %v519
      %v521 = vpop.f32.mrf.mxu0
      %v522 = vadd.f32 %v212, %v521
      %v523 = vand.u32 %v288, 4294901760
      %v524 = vsub.f32 %v288, %v523
      %v525 = vand.u32 %v524, 4294901760
      %v526 = vsub.f32 %v524, %v525
      %v527 = vand.u32 %v526, 4294901760
      %528 = vmatmul.f32.gmra.mxu0 %v527
      %v529 = vpop.f32.mrf.mxu0
      %v530 = vadd.f32 %v212, %v529
      %v531 = vand.u32 %v291, 4294901760
      %v532 = vsub.f32 %v291, %v531
      %v533 = vand.u32 %v532, 4294901760
      %v534 = vsub.f32 %v532, %v533
      %v535 = vand.u32 %v534, 4294901760
      %536 = vmatmul.f32.gmra.mxu0 %v535
      %v537 = vpop.f32.mrf.mxu0
      %v538 = vadd.f32 %v212, %v537
      %v539 = vand.u32 %v294, 4294901760
      %v540 = vsub.f32 %v294, %v539
      %v541 = vand.u32 %v540, 4294901760
      %v542 = vsub.f32 %v540, %v541
      %v543 = vand.u32 %v542, 4294901760
      %544 = vmatmul.f32.gmra.mxu0 %v543
      %v545 = vpop.f32.mrf.mxu0
      %v546 = vadd.f32 %v212, %v545
      %v547 = vand.u32 %v297, 4294901760
      %v548 = vsub.f32 %v297, %v547
      %v549 = vand.u32 %v548, 4294901760
      %v550 = vsub.f32 %v548, %v549
      %v551 = vand.u32 %v550, 4294901760
      %552 = vmatmul.f32.gmra.mxu0 %v551
      %v553 = vpop.f32.mrf.mxu0
      %v554 = vadd.f32 %v212, %v553
      %v555 = vand.u32 %v300, 4294901760
      %v556 = vsub.f32 %v300, %v555
      %v557 = vand.u32 %v556, 4294901760
      %v558 = vsub.f32 %v556, %v557
      %v559 = vand.u32 %v558, 4294901760
      %560 = vmatmul.f32.gmra.mxu0 %v559
      %v561 = vpop.f32.mrf.mxu0
      %v562 = vadd.f32 %v212, %v561
      %v563 = vand.u32 %v303, 4294901760
      %v564 = vsub.f32 %v303, %v563
      %v565 = vand.u32 %v564, 4294901760
      %v566 = vsub.f32 %v564, %v565
      %v567 = vand.u32 %v566, 4294901760
      %568 = vmatmul.f32.gmra.mxu0 %v567
      %v569 = vpop.f32.mrf.mxu0
      %v570 = vadd.f32 %v212, %v569
      %v571 = vand.u32 %v306, 4294901760
      %v572 = vsub.f32 %v306, %v571
      %v573 = vand.u32 %v572, 4294901760
      %v574 = vsub.f32 %v572, %v573
      %v575 = vand.u32 %v574, 4294901760
      %576 = vmatmul.f32.gmra.mxu0 %v575
      %v577 = vpop.f32.mrf.mxu0
      %v578 = vadd.f32 %v212, %v577
      %v579 = vand.u32 %v309, 4294901760
      %v580 = vsub.f32 %v309, %v579
      %v581 = vand.u32 %v580, 4294901760
      %v582 = vsub.f32 %v580, %v581
      %v583 = vand.u32 %v582, 4294901760
      %584 = vmatmul.f32.gmra.mxu0 %v583
      %v585 = vpop.f32.mrf.mxu0
      %v586 = vadd.f32 %v212, %v585
      %587 = vdwg.mxu0
      %588 = vmatpush.msra.mxu0 0.0
      %589 = vmatpush.msra.mxu0 0.0
      %590 = vmatpush.msra.mxu0 0.0
      %591 = vmatpush.msra.mxu0 0.0
      %592 = vmatpush.msra.mxu0 0.0
      %593 = vmatpush.msra.mxu0 0.0
      %594 = vmatpush.msra.mxu0 0.0
      %595 = vmatpush.msra.mxu0 0.0
      %596 = vmatpush.msra.mxu0 0.0
      %597 = vmatpush.msra.mxu0 0.0
      %598 = vmatpush.msra.mxu0 0.0
      %599 = vmatpush.msra.mxu0 0.0
      %v600 = vand.u32 %v209, 4294901760
      %v601 = vsub.f32 %v209, %v600
      %v602 = vand.u32 %v601, 4294901760
      %v603 = vsub.f32 %v601, %v602
      %v604 = vand.u32 %v603, 4294901760
      %605 = vmatpush.msra.mxu0 %v604
      %v606 = vand.u32 %v208, 4294901760
      %v607 = vsub.f32 %v208, %v606
      %v608 = vand.u32 %v607, 4294901760
      %v609 = vsub.f32 %v607, %v608
      %v610 = vand.u32 %v609, 4294901760
      %611 = vmatpush.msra.mxu0 %v610
      %v612 = vand.u32 %v207, 4294901760
      %v613 = vsub.f32 %v207, %v612
      %v614 = vand.u32 %v613, 4294901760
      %v615 = vsub.f32 %v613, %v614
      %v616 = vand.u32 %v615, 4294901760
      %617 = vmatpush.msra.mxu0 %v616
      %v618 = vand.u32 %v206, 4294901760
      %v619 = vsub.f32 %v206, %v618
      %v620 = vand.u32 %v619, 4294901760
      %v621 = vsub.f32 %v619, %v620
      %v622 = vand.u32 %v621, 4294901760
      %623 = vmatpush.msra.mxu0 %v622
      %v624 = vand.u32 %v216, 4294901760
      %625 = vmatmul.f32.gmra.mxu0 %v624
      %v626 = vpop.f32.mrf.mxu0
      %v627 = vadd.f32 %v338, %v626
      %v628 = vand.u32 %v219, 4294901760
      %629 = vmatmul.f32.gmra.mxu0 %v628
      %v630 = vpop.f32.mrf.mxu0
      %v631 = vadd.f32 %v346, %v630
      %v632 = vand.u32 %v222, 4294901760
      %633 = vmatmul.f32.gmra.mxu0 %v632
      %v634 = vpop.f32.mrf.mxu0
      %v635 = vadd.f32 %v354, %v634
      %v636 = vand.u32 %v225, 4294901760
      %637 = vmatmul.f32.gmra.mxu0 %v636
      %v638 = vpop.f32.mrf.mxu0
      %v639 = vadd.f32 %v362, %v638
      %v640 = vand.u32 %v228, 4294901760
      %641 = vmatmul.f32.gmra.mxu0 %v640
      %v642 = vpop.f32.mrf.mxu0
      %v643 = vadd.f32 %v370, %v642
      %v644 = vand.u32 %v231, 4294901760
      %645 = vmatmul.f32.gmra.mxu0 %v644
      %v646 = vpop.f32.mrf.mxu0
      %v647 = vadd.f32 %v378, %v646
      %v648 = vand.u32 %v234, 4294901760
      %649 = vmatmul.f32.gmra.mxu0 %v648
      %v650 = vpop.f32.mrf.mxu0
      %v651 = vadd.f32 %v386, %v650
      %v652 = vand.u32 %v237, 4294901760
      %653 = vmatmul.f32.gmra.mxu0 %v652
      %v654 = vpop.f32.mrf.mxu0
      %v655 = vadd.f32 %v394, %v654
      %v656 = vand.u32 %v240, 4294901760
      %657 = vmatmul.f32.gmra.mxu0 %v656
      %v658 = vpop.f32.mrf.mxu0
      %v659 = vadd.f32 %v402, %v658
      %v660 = vand.u32 %v243, 4294901760
      %661 = vmatmul.f32.gmra.mxu0 %v660
      %v662 = vpop.f32.mrf.mxu0
      %v663 = vadd.f32 %v410, %v662
      %v664 = vand.u32 %v246, 4294901760
      %665 = vmatmul.f32.gmra.mxu0 %v664
      %v666 = vpop.f32.mrf.mxu0
      %v667 = vadd.f32 %v418, %v666
      %v668 = vand.u32 %v249, 4294901760
      %669 = vmatmul.f32.gmra.mxu0 %v668
      %v670 = vpop.f32.mrf.mxu0
      %v671 = vadd.f32 %v426, %v670
      %v672 = vand.u32 %v252, 4294901760
      %673 = vmatmul.f32.gmra.mxu0 %v672
      %v674 = vpop.f32.mrf.mxu0
      %v675 = vadd.f32 %v434, %v674
      %v676 = vand.u32 %v255, 4294901760
      %677 = vmatmul.f32.gmra.mxu0 %v676
      %v678 = vpop.f32.mrf.mxu0
      %v679 = vadd.f32 %v442, %v678
      %v680 = vand.u32 %v258, 4294901760
      %681 = vmatmul.f32.gmra.mxu0 %v680
      %v682 = vpop.f32.mrf.mxu0
      %v683 = vadd.f32 %v450, %v682
      %v684 = vand.u32 %v261, 4294901760
      %685 = vmatmul.f32.gmra.mxu0 %v684
      %v686 = vpop.f32.mrf.mxu0
      %v687 = vadd.f32 %v458, %v686
      %v688 = vand.u32 %v264, 4294901760
      %689 = vmatmul.f32.gmra.mxu0 %v688
      %v690 = vpop.f32.mrf.mxu0
      %v691 = vadd.f32 %v466, %v690
      %v692 = vand.u32 %v267, 4294901760
      %693 = vmatmul.f32.gmra.mxu0 %v692
      %v694 = vpop.f32.mrf.mxu0
      %v695 = vadd.f32 %v474, %v694
      %v696 = vand.u32 %v270, 4294901760
      %697 = vmatmul.f32.gmra.mxu0 %v696
      %v698 = vpop.f32.mrf.mxu0
      %v699 = vadd.f32 %v482, %v698
      %v700 = vand.u32 %v273, 4294901760
      %701 = vmatmul.f32.gmra.mxu0 %v700
      %v702 = vpop.f32.mrf.mxu0
      %v703 = vadd.f32 %v490, %v702
      %v704 = vand.u32 %v276, 4294901760
      %705 = vmatmul.f32.gmra.mxu0 %v704
      %v706 = vpop.f32.mrf.mxu0
      %v707 = vadd.f32 %v498, %v706
      %v708 = vand.u32 %v279, 4294901760
      %709 = vmatmul.f32.gmra.mxu0 %v708
      %v710 = vpop.f32.mrf.mxu0
      %v711 = vadd.f32 %v506, %v710
      %v712 = vand.u32 %v282, 4294901760
      %713 = vmatmul.f32.gmra.mxu0 %v712
      %v714 = vpop.f32.mrf.mxu0
      %v715 = vadd.f32 %v514, %v714
      %v716 = vand.u32 %v285, 4294901760
      %717 = vmatmul.f32.gmra.mxu0 %v716
      %v718 = vpop.f32.mrf.mxu0
      %v719 = vadd.f32 %v522, %v718
      %v720 = vand.u32 %v288, 4294901760
      %721 = vmatmul.f32.gmra.mxu0 %v720
      %v722 = vpop.f32.mrf.mxu0
      %v723 = vadd.f32 %v530, %v722
      %v724 = vand.u32 %v291, 4294901760
      %725 = vmatmul.f32.gmra.mxu0 %v724
      %v726 = vpop.f32.mrf.mxu0
      %v727 = vadd.f32 %v538, %v726
      %v728 = vand.u32 %v294, 4294901760
      %729 = vmatmul.f32.gmra.mxu0 %v728
      %v730 = vpop.f32.mrf.mxu0
      %v731 = vadd.f32 %v546, %v730
      %v732 = vand.u32 %v297, 4294901760
      %733 = vmatmul.f32.gmra.mxu0 %v732
      %v734 = vpop.f32.mrf.mxu0
      %v735 = vadd.f32 %v554, %v734
      %v736 = vand.u32 %v300, 4294901760
      %737 = vmatmul.f32.gmra.mxu0 %v736
      %v738 = vpop.f32.mrf.mxu0
      %v739 = vadd.f32 %v562, %v738
      %v740 = vand.u32 %v303, 4294901760
      %741 = vmatmul.f32.gmra.mxu0 %v740
      %v742 = vpop.f32.mrf.mxu0
      %v743 = vadd.f32 %v570, %v742
      %v744 = vand.u32 %v306, 4294901760
      %745 = vmatmul.f32.gmra.mxu0 %v744
      %v746 = vpop.f32.mrf.mxu0
      %v747 = vadd.f32 %v578, %v746
      %v748 = vand.u32 %v309, 4294901760
      %749 = vmatmul.f32.gmra.mxu0 %v748
      %v750 = vpop.f32.mrf.mxu0
      %v751 = vadd.f32 %v586, %v750
      %752 = vdwg.mxu0
      %753 = vmatpush.msra.mxu0 0.0
      %754 = vmatpush.msra.mxu0 0.0
      %755 = vmatpush.msra.mxu0 0.0
      %756 = vmatpush.msra.mxu0 0.0
      %757 = vmatpush.msra.mxu0 0.0
      %758 = vmatpush.msra.mxu0 0.0
      %759 = vmatpush.msra.mxu0 0.0
      %760 = vmatpush.msra.mxu0 0.0
      %761 = vmatpush.msra.mxu0 0.0
      %762 = vmatpush.msra.mxu0 0.0
      %763 = vmatpush.msra.mxu0 0.0
      %764 = vmatpush.msra.mxu0 0.0
      %v765 = vand.u32 %v209, 4294901760
      %v766 = vsub.f32 %v209, %v765
      %767 = vmatpush.msra.mxu0 %v766
      %v768 = vand.u32 %v208, 4294901760
      %v769 = vsub.f32 %v208, %v768
      %770 = vmatpush.msra.mxu0 %v769
      %v771 = vand.u32 %v207, 4294901760
      %v772 = vsub.f32 %v207, %v771
      %773 = vmatpush.msra.mxu0 %v772
      %v774 = vand.u32 %v206, 4294901760
      %v775 = vsub.f32 %v206, %v774
      %776 = vmatpush.msra.mxu0 %v775
      %v777 = vand.u32 %v216, 4294901760
      %v778 = vsub.f32 %v216, %v777
      %779 = vmatmul.f32.gmra.mxu0 %v778
      %v780 = vpop.f32.mrf.mxu0
      %v781 = vadd.f32 %v627, %v780
      %v782 = vand.u32 %v219, 4294901760
      %v783 = vsub.f32 %v219, %v782
      %784 = vmatmul.f32.gmra.mxu0 %v783
      %v785 = vpop.f32.mrf.mxu0
      %v786 = vadd.f32 %v631, %v785
      %v787 = vand.u32 %v222, 4294901760
      %v788 = vsub.f32 %v222, %v787
      %789 = vmatmul.f32.gmra.mxu0 %v788
      %v790 = vpop.f32.mrf.mxu0
      %v791 = vadd.f32 %v635, %v790
      %v792 = vand.u32 %v225, 4294901760
      %v793 = vsub.f32 %v225, %v792
      %794 = vmatmul.f32.gmra.mxu0 %v793
      %v795 = vpop.f32.mrf.mxu0
      %v796 = vadd.f32 %v639, %v795
      %v797 = vand.u32 %v228, 4294901760
      %v798 = vsub.f32 %v228, %v797
      %799 = vmatmul.f32.gmra.mxu0 %v798
      %v800 = vpop.f32.mrf.mxu0
      %v801 = vadd.f32 %v643, %v800
      %v802 = vand.u32 %v231, 4294901760
      %v803 = vsub.f32 %v231, %v802
      %804 = vmatmul.f32.gmra.mxu0 %v803
      %v805 = vpop.f32.mrf.mxu0
      %v806 = vadd.f32 %v647, %v805
      %v807 = vand.u32 %v234, 4294901760
      %v808 = vsub.f32 %v234, %v807
      %809 = vmatmul.f32.gmra.mxu0 %v808
      %v810 = vpop.f32.mrf.mxu0
      %v811 = vadd.f32 %v651, %v810
      %v812 = vand.u32 %v237, 4294901760
      %v813 = vsub.f32 %v237, %v812
      %814 = vmatmul.f32.gmra.mxu0 %v813
      %v815 = vpop.f32.mrf.mxu0
      %v816 = vadd.f32 %v655, %v815
      %v817 = vand.u32 %v240, 4294901760
      %v818 = vsub.f32 %v240, %v817
      %819 = vmatmul.f32.gmra.mxu0 %v818
      %v820 = vpop.f32.mrf.mxu0
      %v821 = vadd.f32 %v659, %v820
      %v822 = vand.u32 %v243, 4294901760
      %v823 = vsub.f32 %v243, %v822
      %824 = vmatmul.f32.gmra.mxu0 %v823
      %v825 = vpop.f32.mrf.mxu0
      %v826 = vadd.f32 %v663, %v825
      %v827 = vand.u32 %v246, 4294901760
      %v828 = vsub.f32 %v246, %v827
      %829 = vmatmul.f32.gmra.mxu0 %v828
      %v830 = vpop.f32.mrf.mxu0
      %v831 = vadd.f32 %v667, %v830
      %v832 = vand.u32 %v249, 4294901760
      %v833 = vsub.f32 %v249, %v832
      %834 = vmatmul.f32.gmra.mxu0 %v833
      %v835 = vpop.f32.mrf.mxu0
      %v836 = vadd.f32 %v671, %v835
      %v837 = vand.u32 %v252, 4294901760
      %v838 = vsub.f32 %v252, %v837
      %839 = vmatmul.f32.gmra.mxu0 %v838
      %v840 = vpop.f32.mrf.mxu0
      %v841 = vadd.f32 %v675, %v840
      %v842 = vand.u32 %v255, 4294901760
      %v843 = vsub.f32 %v255, %v842
      %844 = vmatmul.f32.gmra.mxu0 %v843
      %v845 = vpop.f32.mrf.mxu0
      %v846 = vadd.f32 %v679, %v845
      %v847 = vand.u32 %v258, 4294901760
      %v848 = vsub.f32 %v258, %v847
      %849 = vmatmul.f32.gmra.mxu0 %v848
      %v850 = vpop.f32.mrf.mxu0
      %v851 = vadd.f32 %v683, %v850
      %v852 = vand.u32 %v261, 4294901760
      %v853 = vsub.f32 %v261, %v852
      %854 = vmatmul.f32.gmra.mxu0 %v853
      %v855 = vpop.f32.mrf.mxu0
      %v856 = vadd.f32 %v687, %v855
      %v857 = vand.u32 %v264, 4294901760
      %v858 = vsub.f32 %v264, %v857
      %859 = vmatmul.f32.gmra.mxu0 %v858
      %v860 = vpop.f32.mrf.mxu0
      %v861 = vadd.f32 %v691, %v860
      %v862 = vand.u32 %v267, 4294901760
      %v863 = vsub.f32 %v267, %v862
      %864 = vmatmul.f32.gmra.mxu0 %v863
      %v865 = vpop.f32.mrf.mxu0
      %v866 = vadd.f32 %v695, %v865
      %v867 = vand.u32 %v270, 4294901760
      %v868 = vsub.f32 %v270, %v867
      %869 = vmatmul.f32.gmra.mxu0 %v868
      %v870 = vpop.f32.mrf.mxu0
      %v871 = vadd.f32 %v699, %v870
      %v872 = vand.u32 %v273, 4294901760
      %v873 = vsub.f32 %v273, %v872
      %874 = vmatmul.f32.gmra.mxu0 %v873
      %v875 = vpop.f32.mrf.mxu0
      %v876 = vadd.f32 %v703, %v875
      %v877 = vand.u32 %v276, 4294901760
      %v878 = vsub.f32 %v276, %v877
      %879 = vmatmul.f32.gmra.mxu0 %v878
      %v880 = vpop.f32.mrf.mxu0
      %v881 = vadd.f32 %v707, %v880
      %v882 = vand.u32 %v279, 4294901760
      %v883 = vsub.f32 %v279, %v882
      %884 = vmatmul.f32.gmra.mxu0 %v883
      %v885 = vpop.f32.mrf.mxu0
      %v886 = vadd.f32 %v711, %v885
      %v887 = vand.u32 %v282, 4294901760
      %v888 = vsub.f32 %v282, %v887
      %889 = vmatmul.f32.gmra.mxu0 %v888
      %v890 = vpop.f32.mrf.mxu0
      %v891 = vadd.f32 %v715, %v890
      %v892 = vand.u32 %v285, 4294901760
      %v893 = vsub.f32 %v285, %v892
      %894 = vmatmul.f32.gmra.mxu0 %v893
      %v895 = vpop.f32.mrf.mxu0
      %v896 = vadd.f32 %v719, %v895
      %v897 = vand.u32 %v288, 4294901760
      %v898 = vsub.f32 %v288, %v897
      %899 = vmatmul.f32.gmra.mxu0 %v898
      %v900 = vpop.f32.mrf.mxu0
      %v901 = vadd.f32 %v723, %v900
      %v902 = vand.u32 %v291, 4294901760
      %v903 = vsub.f32 %v291, %v902
      %904 = vmatmul.f32.gmra.mxu0 %v903
      %v905 = vpop.f32.mrf.mxu0
      %v906 = vadd.f32 %v727, %v905
      %v907 = vand.u32 %v294, 4294901760
      %v908 = vsub.f32 %v294, %v907
      %909 = vmatmul.f32.gmra.mxu0 %v908
      %v910 = vpop.f32.mrf.mxu0
      %v911 = vadd.f32 %v731, %v910
      %v912 = vand.u32 %v297, 4294901760
      %v913 = vsub.f32 %v297, %v912
      %914 = vmatmul.f32.gmra.mxu0 %v913
      %v915 = vpop.f32.mrf.mxu0
      %v916 = vadd.f32 %v735, %v915
      %v917 = vand.u32 %v300, 4294901760
      %v918 = vsub.f32 %v300, %v917
      %919 = vmatmul.f32.gmra.mxu0 %v918
      %v920 = vpop.f32.mrf.mxu0
      %v921 = vadd.f32 %v739, %v920
      %v922 = vand.u32 %v303, 4294901760
      %v923 = vsub.f32 %v303, %v922
      %924 = vmatmul.f32.gmra.mxu0 %v923
      %v925 = vpop.f32.mrf.mxu0
      %v926 = vadd.f32 %v743, %v925
      %v927 = vand.u32 %v306, 4294901760
      %v928 = vsub.f32 %v306, %v927
      %929 = vmatmul.f32.gmra.mxu0 %v928
      %v930 = vpop.f32.mrf.mxu0
      %v931 = vadd.f32 %v747, %v930
      %v932 = vand.u32 %v309, 4294901760
      %v933 = vsub.f32 %v309, %v932
      %934 = vmatmul.f32.gmra.mxu0 %v933
      %v935 = vpop.f32.mrf.mxu0
      %v936 = vadd.f32 %v751, %v935
      %937 = vdwg.mxu0
      %938 = vmatpush.msra.mxu0 0.0
      %939 = vmatpush.msra.mxu0 0.0
      %940 = vmatpush.msra.mxu0 0.0
      %941 = vmatpush.msra.mxu0 0.0
      %942 = vmatpush.msra.mxu0 0.0
      %943 = vmatpush.msra.mxu0 0.0
      %944 = vmatpush.msra.mxu0 0.0
      %945 = vmatpush.msra.mxu0 0.0
      %946 = vmatpush.msra.mxu0 0.0
      %947 = vmatpush.msra.mxu0 0.0
      %948 = vmatpush.msra.mxu0 0.0
      %949 = vmatpush.msra.mxu0 0.0
      %v950 = vand.u32 %v209, 4294901760
      %951 = vmatpush.msra.mxu0 %v950
      %v952 = vand.u32 %v208, 4294901760
      %953 = vmatpush.msra.mxu0 %v952
      %v954 = vand.u32 %v207, 4294901760
      %955 = vmatpush.msra.mxu0 %v954
      %v956 = vand.u32 %v206, 4294901760
      %957 = vmatpush.msra.mxu0 %v956
      %v958 = vand.u32 %v216, 4294901760
      %v959 = vsub.f32 %v216, %v958
      %v960 = vand.u32 %v959, 4294901760
      %961 = vmatmul.f32.gmra.mxu0 %v960
      %v962 = vpop.f32.mrf.mxu0
      %v963 = vadd.f32 %v781, %v962
      %v964 = vand.u32 %v219, 4294901760
      %v965 = vsub.f32 %v219, %v964
      %v966 = vand.u32 %v965, 4294901760
      %967 = vmatmul.f32.gmra.mxu0 %v966
      %v968 = vpop.f32.mrf.mxu0
      %v969 = vadd.f32 %v786, %v968
      %v970 = vand.u32 %v222, 4294901760
      %v971 = vsub.f32 %v222, %v970
      %v972 = vand.u32 %v971, 4294901760
      %973 = vmatmul.f32.gmra.mxu0 %v972
      %v974 = vpop.f32.mrf.mxu0
      %v975 = vadd.f32 %v791, %v974
      %v976 = vand.u32 %v225, 4294901760
      %v977 = vsub.f32 %v225, %v976
      %v978 = vand.u32 %v977, 4294901760
      %979 = vmatmul.f32.gmra.mxu0 %v978
      %v980 = vpop.f32.mrf.mxu0
      %v981 = vadd.f32 %v796, %v980
      %v982 = vand.u32 %v228, 4294901760
      %v983 = vsub.f32 %v228, %v982
      %v984 = vand.u32 %v983, 4294901760
      %985 = vmatmul.f32.gmra.mxu0 %v984
      %v986 = vpop.f32.mrf.mxu0
      %v987 = vadd.f32 %v801, %v986
      %v988 = vand.u32 %v231, 4294901760
      %v989 = vsub.f32 %v231, %v988
      %v990 = vand.u32 %v989, 4294901760
      %991 = vmatmul.f32.gmra.mxu0 %v990
      %v992 = vpop.f32.mrf.mxu0
      %v993 = vadd.f32 %v806, %v992
      %v994 = vand.u32 %v234, 4294901760
      %v995 = vsub.f32 %v234, %v994
      %v996 = vand.u32 %v995, 4294901760
      %997 = vmatmul.f32.gmra.mxu0 %v996
      %v998 = vpop.f32.mrf.mxu0
      %v999 = vadd.f32 %v811, %v998
      %v1000 = vand.u32 %v237, 4294901760
      %v1001 = vsub.f32 %v237, %v1000
      %v1002 = vand.u32 %v1001, 4294901760
      %1003 = vmatmul.f32.gmra.mxu0 %v1002
      %v1004 = vpop.f32.mrf.mxu0
      %v1005 = vadd.f32 %v816, %v1004
      %v1006 = vand.u32 %v240, 4294901760
      %v1007 = vsub.f32 %v240, %v1006
      %v1008 = vand.u32 %v1007, 4294901760
      %1009 = vmatmul.f32.gmra.mxu0 %v1008
      %v1010 = vpop.f32.mrf.mxu0
      %v1011 = vadd.f32 %v821, %v1010
      %v1012 = vand.u32 %v243, 4294901760
      %v1013 = vsub.f32 %v243, %v1012
      %v1014 = vand.u32 %v1013, 4294901760
      %1015 = vmatmul.f32.gmra.mxu0 %v1014
      %v1016 = vpop.f32.mrf.mxu0
      %v1017 = vadd.f32 %v826, %v1016
      %v1018 = vand.u32 %v246, 4294901760
      %v1019 = vsub.f32 %v246, %v1018
      %v1020 = vand.u32 %v1019, 4294901760
      %1021 = vmatmul.f32.gmra.mxu0 %v1020
      %v1022 = vpop.f32.mrf.mxu0
      %v1023 = vadd.f32 %v831, %v1022
      %v1024 = vand.u32 %v249, 4294901760
      %v1025 = vsub.f32 %v249, %v1024
      %v1026 = vand.u32 %v1025, 4294901760
      %1027 = vmatmul.f32.gmra.mxu0 %v1026
      %v1028 = vpop.f32.mrf.mxu0
      %v1029 = vadd.f32 %v836, %v1028
      %v1030 = vand.u32 %v252, 4294901760
      %v1031 = vsub.f32 %v252, %v1030
      %v1032 = vand.u32 %v1031, 4294901760
      %1033 = vmatmul.f32.gmra.mxu0 %v1032
      %v1034 = vpop.f32.mrf.mxu0
      %v1035 = vadd.f32 %v841, %v1034
      %v1036 = vand.u32 %v255, 4294901760
      %v1037 = vsub.f32 %v255, %v1036
      %v1038 = vand.u32 %v1037, 4294901760
      %1039 = vmatmul.f32.gmra.mxu0 %v1038
      %v1040 = vpop.f32.mrf.mxu0
      %v1041 = vadd.f32 %v846, %v1040
      %v1042 = vand.u32 %v258, 4294901760
      %v1043 = vsub.f32 %v258, %v1042
      %v1044 = vand.u32 %v1043, 4294901760
      %1045 = vmatmul.f32.gmra.mxu0 %v1044
      %v1046 = vpop.f32.mrf.mxu0
      %v1047 = vadd.f32 %v851, %v1046
      %v1048 = vand.u32 %v261, 4294901760
      %v1049 = vsub.f32 %v261, %v1048
      %v1050 = vand.u32 %v1049, 4294901760
      %1051 = vmatmul.f32.gmra.mxu0 %v1050
      %v1052 = vpop.f32.mrf.mxu0
      %v1053 = vadd.f32 %v856, %v1052
      %v1054 = vand.u32 %v264, 4294901760
      %v1055 = vsub.f32 %v264, %v1054
      %v1056 = vand.u32 %v1055, 4294901760
      %1057 = vmatmul.f32.gmra.mxu0 %v1056
      %v1058 = vpop.f32.mrf.mxu0
      %v1059 = vadd.f32 %v861, %v1058
      %v1060 = vand.u32 %v267, 4294901760
      %v1061 = vsub.f32 %v267, %v1060
      %v1062 = vand.u32 %v1061, 4294901760
      %1063 = vmatmul.f32.gmra.mxu0 %v1062
      %v1064 = vpop.f32.mrf.mxu0
      %v1065 = vadd.f32 %v866, %v1064
      %v1066 = vand.u32 %v270, 4294901760
      %v1067 = vsub.f32 %v270, %v1066
      %v1068 = vand.u32 %v1067, 4294901760
      %1069 = vmatmul.f32.gmra.mxu0 %v1068
      %v1070 = vpop.f32.mrf.mxu0
      %v1071 = vadd.f32 %v871, %v1070
      %v1072 = vand.u32 %v273, 4294901760
      %v1073 = vsub.f32 %v273, %v1072
      %v1074 = vand.u32 %v1073, 4294901760
      %1075 = vmatmul.f32.gmra.mxu0 %v1074
      %v1076 = vpop.f32.mrf.mxu0
      %v1077 = vadd.f32 %v876, %v1076
      %v1078 = vand.u32 %v276, 4294901760
      %v1079 = vsub.f32 %v276, %v1078
      %v1080 = vand.u32 %v1079, 4294901760
      %1081 = vmatmul.f32.gmra.mxu0 %v1080
      %v1082 = vpop.f32.mrf.mxu0
      %v1083 = vadd.f32 %v881, %v1082
      %v1084 = vand.u32 %v279, 4294901760
      %v1085 = vsub.f32 %v279, %v1084
      %v1086 = vand.u32 %v1085, 4294901760
      %1087 = vmatmul.f32.gmra.mxu0 %v1086
      %v1088 = vpop.f32.mrf.mxu0
      %v1089 = vadd.f32 %v886, %v1088
      %v1090 = vand.u32 %v282, 4294901760
      %v1091 = vsub.f32 %v282, %v1090
      %v1092 = vand.u32 %v1091, 4294901760
      %1093 = vmatmul.f32.gmra.mxu0 %v1092
      %v1094 = vpop.f32.mrf.mxu0
      %v1095 = vadd.f32 %v891, %v1094
      %v1096 = vand.u32 %v285, 4294901760
      %v1097 = vsub.f32 %v285, %v1096
      %v1098 = vand.u32 %v1097, 4294901760
      %1099 = vmatmul.f32.gmra.mxu0 %v1098
      %v1100 = vpop.f32.mrf.mxu0
      %v1101 = vadd.f32 %v896, %v1100
      %v1102 = vand.u32 %v288, 4294901760
      %v1103 = vsub.f32 %v288, %v1102
      %v1104 = vand.u32 %v1103, 4294901760
      %1105 = vmatmul.f32.gmra.mxu0 %v1104
      %v1106 = vpop.f32.mrf.mxu0
      %v1107 = vadd.f32 %v901, %v1106
      %v1108 = vand.u32 %v291, 4294901760
      %v1109 = vsub.f32 %v291, %v1108
      %v1110 = vand.u32 %v1109, 4294901760
      %1111 = vmatmul.f32.gmra.mxu0 %v1110
      %v1112 = vpop.f32.mrf.mxu0
      %v1113 = vadd.f32 %v906, %v1112
      %v1114 = vand.u32 %v294, 4294901760
      %v1115 = vsub.f32 %v294, %v1114
      %v1116 = vand.u32 %v1115, 4294901760
      %1117 = vmatmul.f32.gmra.mxu0 %v1116
      %v1118 = vpop.f32.mrf.mxu0
      %v1119 = vadd.f32 %v911, %v1118
      %v1120 = vand.u32 %v297, 4294901760
      %v1121 = vsub.f32 %v297, %v1120
      %v1122 = vand.u32 %v1121, 4294901760
      %1123 = vmatmul.f32.gmra.mxu0 %v1122
      %v1124 = vpop.f32.mrf.mxu0
      %v1125 = vadd.f32 %v916, %v1124
      %v1126 = vand.u32 %v300, 4294901760
      %v1127 = vsub.f32 %v300, %v1126
      %v1128 = vand.u32 %v1127, 4294901760
      %1129 = vmatmul.f32.gmra.mxu0 %v1128
      %v1130 = vpop.f32.mrf.mxu0
      %v1131 = vadd.f32 %v921, %v1130
      %v1132 = vand.u32 %v303, 4294901760
      %v1133 = vsub.f32 %v303, %v1132
      %v1134 = vand.u32 %v1133, 4294901760
      %1135 = vmatmul.f32.gmra.mxu0 %v1134
      %v1136 = vpop.f32.mrf.mxu0
      %v1137 = vadd.f32 %v926, %v1136
      %v1138 = vand.u32 %v306, 4294901760
      %v1139 = vsub.f32 %v306, %v1138
      %v1140 = vand.u32 %v1139, 4294901760
      %1141 = vmatmul.f32.gmra.mxu0 %v1140
      %v1142 = vpop.f32.mrf.mxu0
      %v1143 = vadd.f32 %v931, %v1142
      %v1144 = vand.u32 %v309, 4294901760
      %v1145 = vsub.f32 %v309, %v1144
      %v1146 = vand.u32 %v1145, 4294901760
      %1147 = vmatmul.f32.gmra.mxu0 %v1146
      %v1148 = vpop.f32.mrf.mxu0
      %v1149 = vadd.f32 %v936, %v1148
      %1150 = vdwg.mxu0
      %1151 = vmatpush.msra.mxu0 0.0
      %1152 = vmatpush.msra.mxu0 0.0
      %1153 = vmatpush.msra.mxu0 0.0
      %1154 = vmatpush.msra.mxu0 0.0
      %1155 = vmatpush.msra.mxu0 0.0
      %1156 = vmatpush.msra.mxu0 0.0
      %1157 = vmatpush.msra.mxu0 0.0
      %1158 = vmatpush.msra.mxu0 0.0
      %1159 = vmatpush.msra.mxu0 0.0
      %1160 = vmatpush.msra.mxu0 0.0
      %1161 = vmatpush.msra.mxu0 0.0
      %1162 = vmatpush.msra.mxu0 0.0
      %v1163 = vand.u32 %v209, 4294901760
      %v1164 = vsub.f32 %v209, %v1163
      %v1165 = vand.u32 %v1164, 4294901760
      %1166 = vmatpush.msra.mxu0 %v1165
      %v1167 = vand.u32 %v208, 4294901760
      %v1168 = vsub.f32 %v208, %v1167
      %v1169 = vand.u32 %v1168, 4294901760
      %1170 = vmatpush.msra.mxu0 %v1169
      %v1171 = vand.u32 %v207, 4294901760
      %v1172 = vsub.f32 %v207, %v1171
      %v1173 = vand.u32 %v1172, 4294901760
      %1174 = vmatpush.msra.mxu0 %v1173
      %v1175 = vand.u32 %v206, 4294901760
      %v1176 = vsub.f32 %v206, %v1175
      %v1177 = vand.u32 %v1176, 4294901760
      %1178 = vmatpush.msra.mxu0 %v1177
      %v1179 = vand.u32 %v216, 4294901760
      %1180 = vmatmul.f32.gmra.mxu0 %v1179
      %v1181 = vpop.f32.mrf.mxu0
      %v1182 = vadd.f32 %v963, %v1181
      %v1183 = vand.u32 %v219, 4294901760
      %1184 = vmatmul.f32.gmra.mxu0 %v1183
      %v1185 = vpop.f32.mrf.mxu0
      %v1186 = vadd.f32 %v969, %v1185
      %v1187 = vand.u32 %v222, 4294901760
      %1188 = vmatmul.f32.gmra.mxu0 %v1187
      %v1189 = vpop.f32.mrf.mxu0
      %v1190 = vadd.f32 %v975, %v1189
      %v1191 = vand.u32 %v225, 4294901760
      %1192 = vmatmul.f32.gmra.mxu0 %v1191
      %v1193 = vpop.f32.mrf.mxu0
      %v1194 = vadd.f32 %v981, %v1193
      %v1195 = vand.u32 %v228, 4294901760
      %1196 = vmatmul.f32.gmra.mxu0 %v1195
      %v1197 = vpop.f32.mrf.mxu0
      %v1198 = vadd.f32 %v987, %v1197
      %v1199 = vand.u32 %v231, 4294901760
      %1200 = vmatmul.f32.gmra.mxu0 %v1199
      %v1201 = vpop.f32.mrf.mxu0
      %v1202 = vadd.f32 %v993, %v1201
      %v1203 = vand.u32 %v234, 4294901760
      %1204 = vmatmul.f32.gmra.mxu0 %v1203
      %v1205 = vpop.f32.mrf.mxu0
      %v1206 = vadd.f32 %v999, %v1205
      %v1207 = vand.u32 %v237, 4294901760
      %1208 = vmatmul.f32.gmra.mxu0 %v1207
      %v1209 = vpop.f32.mrf.mxu0
      %v1210 = vadd.f32 %v1005, %v1209
      %v1211 = vand.u32 %v240, 4294901760
      %1212 = vmatmul.f32.gmra.mxu0 %v1211
      %v1213 = vpop.f32.mrf.mxu0
      %v1214 = vadd.f32 %v1011, %v1213
      %v1215 = vand.u32 %v243, 4294901760
      %1216 = vmatmul.f32.gmra.mxu0 %v1215
      %v1217 = vpop.f32.mrf.mxu0
      %v1218 = vadd.f32 %v1017, %v1217
      %v1219 = vand.u32 %v246, 4294901760
      %1220 = vmatmul.f32.gmra.mxu0 %v1219
      %v1221 = vpop.f32.mrf.mxu0
      %v1222 = vadd.f32 %v1023, %v1221
      %v1223 = vand.u32 %v249, 4294901760
      %1224 = vmatmul.f32.gmra.mxu0 %v1223
      %v1225 = vpop.f32.mrf.mxu0
      %v1226 = vadd.f32 %v1029, %v1225
      %v1227 = vand.u32 %v252, 4294901760
      %1228 = vmatmul.f32.gmra.mxu0 %v1227
      %v1229 = vpop.f32.mrf.mxu0
      %v1230 = vadd.f32 %v1035, %v1229
      %v1231 = vand.u32 %v255, 4294901760
      %1232 = vmatmul.f32.gmra.mxu0 %v1231
      %v1233 = vpop.f32.mrf.mxu0
      %v1234 = vadd.f32 %v1041, %v1233
      %v1235 = vand.u32 %v258, 4294901760
      %1236 = vmatmul.f32.gmra.mxu0 %v1235
      %v1237 = vpop.f32.mrf.mxu0
      %v1238 = vadd.f32 %v1047, %v1237
      %v1239 = vand.u32 %v261, 4294901760
      %1240 = vmatmul.f32.gmra.mxu0 %v1239
      %v1241 = vpop.f32.mrf.mxu0
      %v1242 = vadd.f32 %v1053, %v1241
      %v1243 = vand.u32 %v264, 4294901760
      %1244 = vmatmul.f32.gmra.mxu0 %v1243
      %v1245 = vpop.f32.mrf.mxu0
      %v1246 = vadd.f32 %v1059, %v1245
      %v1247 = vand.u32 %v267, 4294901760
      %1248 = vmatmul.f32.gmra.mxu0 %v1247
      %v1249 = vpop.f32.mrf.mxu0
      %v1250 = vadd.f32 %v1065, %v1249
      %v1251 = vand.u32 %v270, 4294901760
      %1252 = vmatmul.f32.gmra.mxu0 %v1251
      %v1253 = vpop.f32.mrf.mxu0
      %v1254 = vadd.f32 %v1071, %v1253
      %v1255 = vand.u32 %v273, 4294901760
      %1256 = vmatmul.f32.gmra.mxu0 %v1255
      %v1257 = vpop.f32.mrf.mxu0
      %v1258 = vadd.f32 %v1077, %v1257
      %v1259 = vand.u32 %v276, 4294901760
      %1260 = vmatmul.f32.gmra.mxu0 %v1259
      %v1261 = vpop.f32.mrf.mxu0
      %v1262 = vadd.f32 %v1083, %v1261
      %v1263 = vand.u32 %v279, 4294901760
      %1264 = vmatmul.f32.gmra.mxu0 %v1263
      %v1265 = vpop.f32.mrf.mxu0
      %v1266 = vadd.f32 %v1089, %v1265
      %v1267 = vand.u32 %v282, 4294901760
      %1268 = vmatmul.f32.gmra.mxu0 %v1267
      %v1269 = vpop.f32.mrf.mxu0
      %v1270 = vadd.f32 %v1095, %v1269
      %v1271 = vand.u32 %v285, 4294901760
      %1272 = vmatmul.f32.gmra.mxu0 %v1271
      %v1273 = vpop.f32.mrf.mxu0
      %v1274 = vadd.f32 %v1101, %v1273
      %v1275 = vand.u32 %v288, 4294901760
      %1276 = vmatmul.f32.gmra.mxu0 %v1275
      %v1277 = vpop.f32.mrf.mxu0
      %v1278 = vadd.f32 %v1107, %v1277
      %v1279 = vand.u32 %v291, 4294901760
      %1280 = vmatmul.f32.gmra.mxu0 %v1279
      %v1281 = vpop.f32.mrf.mxu0
      %v1282 = vadd.f32 %v1113, %v1281
      %v1283 = vand.u32 %v294, 4294901760
      %1284 = vmatmul.f32.gmra.mxu0 %v1283
      %v1285 = vpop.f32.mrf.mxu0
      %v1286 = vadd.f32 %v1119, %v1285
      %v1287 = vand.u32 %v297, 4294901760
      %1288 = vmatmul.f32.gmra.mxu0 %v1287
      %v1289 = vpop.f32.mrf.mxu0
      %v1290 = vadd.f32 %v1125, %v1289
      %v1291 = vand.u32 %v300, 4294901760
      %1292 = vmatmul.f32.gmra.mxu0 %v1291
      %v1293 = vpop.f32.mrf.mxu0
      %v1294 = vadd.f32 %v1131, %v1293
      %v1295 = vand.u32 %v303, 4294901760
      %1296 = vmatmul.f32.gmra.mxu0 %v1295
      %v1297 = vpop.f32.mrf.mxu0
      %v1298 = vadd.f32 %v1137, %v1297
      %v1299 = vand.u32 %v306, 4294901760
      %1300 = vmatmul.f32.gmra.mxu0 %v1299
      %v1301 = vpop.f32.mrf.mxu0
      %v1302 = vadd.f32 %v1143, %v1301
      %v1303 = vand.u32 %v309, 4294901760
      %1304 = vmatmul.f32.gmra.mxu0 %v1303
      %v1305 = vpop.f32.mrf.mxu0
      %v1306 = vadd.f32 %v1149, %v1305
      %1307 = vdwg.mxu0
      %1308 = vmatpush.msra.mxu0 0.0
      %1309 = vmatpush.msra.mxu0 0.0
      %1310 = vmatpush.msra.mxu0 0.0
      %1311 = vmatpush.msra.mxu0 0.0
      %1312 = vmatpush.msra.mxu0 0.0
      %1313 = vmatpush.msra.mxu0 0.0
      %1314 = vmatpush.msra.mxu0 0.0
      %1315 = vmatpush.msra.mxu0 0.0
      %1316 = vmatpush.msra.mxu0 0.0
      %1317 = vmatpush.msra.mxu0 0.0
      %1318 = vmatpush.msra.mxu0 0.0
      %1319 = vmatpush.msra.mxu0 0.0
      %v1320 = vand.u32 %v209, 4294901760
      %1321 = vmatpush.msra.mxu0 %v1320
      %v1322 = vand.u32 %v208, 4294901760
      %1323 = vmatpush.msra.mxu0 %v1322
      %v1324 = vand.u32 %v207, 4294901760
      %1325 = vmatpush.msra.mxu0 %v1324
      %v1326 = vand.u32 %v206, 4294901760
      %1327 = vmatpush.msra.mxu0 %v1326
      %v1328 = vand.u32 %v216, 4294901760
      %1329 = vmatmul.f32.gmra.mxu0 %v1328
      %v1330 = vpop.f32.mrf.mxu0
      %v1331 = vadd.f32 %v1182, %v1330
      %v1332 = vand.u32 %v219, 4294901760
      %1333 = vmatmul.f32.gmra.mxu0 %v1332
      %v1334 = vpop.f32.mrf.mxu0
      %v1335 = vadd.f32 %v1186, %v1334
      %v1336 = vand.u32 %v222, 4294901760
      %1337 = vmatmul.f32.gmra.mxu0 %v1336
      %v1338 = vpop.f32.mrf.mxu0
      %v1339 = vadd.f32 %v1190, %v1338
      %v1340 = vand.u32 %v225, 4294901760
      %1341 = vmatmul.f32.gmra.mxu0 %v1340
      %v1342 = vpop.f32.mrf.mxu0
      %v1343 = vadd.f32 %v1194, %v1342
      %v1344 = vand.u32 %v228, 4294901760
      %1345 = vmatmul.f32.gmra.mxu0 %v1344
      %v1346 = vpop.f32.mrf.mxu0
      %v1347 = vadd.f32 %v1198, %v1346
      %v1348 = vand.u32 %v231, 4294901760
      %1349 = vmatmul.f32.gmra.mxu0 %v1348
      %v1350 = vpop.f32.mrf.mxu0
      %v1351 = vadd.f32 %v1202, %v1350
      %v1352 = vand.u32 %v234, 4294901760
      %1353 = vmatmul.f32.gmra.mxu0 %v1352
      %v1354 = vpop.f32.mrf.mxu0
      %v1355 = vadd.f32 %v1206, %v1354
      %v1356 = vand.u32 %v237, 4294901760
      %1357 = vmatmul.f32.gmra.mxu0 %v1356
      %v1358 = vpop.f32.mrf.mxu0
      %v1359 = vadd.f32 %v1210, %v1358
      %v1360 = vand.u32 %v240, 4294901760
      %1361 = vmatmul.f32.gmra.mxu0 %v1360
      %v1362 = vpop.f32.mrf.mxu0
      %v1363 = vadd.f32 %v1214, %v1362
      %v1364 = vand.u32 %v243, 4294901760
      %1365 = vmatmul.f32.gmra.mxu0 %v1364
      %v1366 = vpop.f32.mrf.mxu0
      %v1367 = vadd.f32 %v1218, %v1366
      %v1368 = vand.u32 %v246, 4294901760
      %1369 = vmatmul.f32.gmra.mxu0 %v1368
      %v1370 = vpop.f32.mrf.mxu0
      %v1371 = vadd.f32 %v1222, %v1370
      %v1372 = vand.u32 %v249, 4294901760
      %1373 = vmatmul.f32.gmra.mxu0 %v1372
      %v1374 = vpop.f32.mrf.mxu0
      %v1375 = vadd.f32 %v1226, %v1374
      %v1376 = vand.u32 %v252, 4294901760
      %1377 = vmatmul.f32.gmra.mxu0 %v1376
      %v1378 = vpop.f32.mrf.mxu0
      %v1379 = vadd.f32 %v1230, %v1378
      %v1380 = vand.u32 %v255, 4294901760
      %1381 = vmatmul.f32.gmra.mxu0 %v1380
      %v1382 = vpop.f32.mrf.mxu0
      %v1383 = vadd.f32 %v1234, %v1382
      %v1384 = vand.u32 %v258, 4294901760
      %1385 = vmatmul.f32.gmra.mxu0 %v1384
      %v1386 = vpop.f32.mrf.mxu0
      %v1387 = vadd.f32 %v1238, %v1386
      %v1388 = vand.u32 %v261, 4294901760
      %1389 = vmatmul.f32.gmra.mxu0 %v1388
      %v1390 = vpop.f32.mrf.mxu0
      %v1391 = vadd.f32 %v1242, %v1390
      %v1392 = vand.u32 %v264, 4294901760
      %1393 = vmatmul.f32.gmra.mxu0 %v1392
      %v1394 = vpop.f32.mrf.mxu0
      %v1395 = vadd.f32 %v1246, %v1394
      %v1396 = vand.u32 %v267, 4294901760
      %1397 = vmatmul.f32.gmra.mxu0 %v1396
      %v1398 = vpop.f32.mrf.mxu0
      %v1399 = vadd.f32 %v1250, %v1398
      %v1400 = vand.u32 %v270, 4294901760
      %1401 = vmatmul.f32.gmra.mxu0 %v1400
      %v1402 = vpop.f32.mrf.mxu0
      %v1403 = vadd.f32 %v1254, %v1402
      %v1404 = vand.u32 %v273, 4294901760
      %1405 = vmatmul.f32.gmra.mxu0 %v1404
      %v1406 = vpop.f32.mrf.mxu0
      %v1407 = vadd.f32 %v1258, %v1406
      %v1408 = vand.u32 %v276, 4294901760
      %1409 = vmatmul.f32.gmra.mxu0 %v1408
      %v1410 = vpop.f32.mrf.mxu0
      %v1411 = vadd.f32 %v1262, %v1410
      %v1412 = vand.u32 %v279, 4294901760
      %1413 = vmatmul.f32.gmra.mxu0 %v1412
      %v1414 = vpop.f32.mrf.mxu0
      %v1415 = vadd.f32 %v1266, %v1414
      %v1416 = vand.u32 %v282, 4294901760
      %1417 = vmatmul.f32.gmra.mxu0 %v1416
      %v1418 = vpop.f32.mrf.mxu0
      %v1419 = vadd.f32 %v1270, %v1418
      %v1420 = vand.u32 %v285, 4294901760
      %1421 = vmatmul.f32.gmra.mxu0 %v1420
      %v1422 = vpop.f32.mrf.mxu0
      %v1423 = vadd.f32 %v1274, %v1422
      %v1424 = vand.u32 %v288, 4294901760
      %1425 = vmatmul.f32.gmra.mxu0 %v1424
      %v1426 = vpop.f32.mrf.mxu0
      %v1427 = vadd.f32 %v1278, %v1426
      %v1428 = vand.u32 %v291, 4294901760
      %1429 = vmatmul.f32.gmra.mxu0 %v1428
      %v1430 = vpop.f32.mrf.mxu0
      %v1431 = vadd.f32 %v1282, %v1430
      %v1432 = vand.u32 %v294, 4294901760
      %1433 = vmatmul.f32.gmra.mxu0 %v1432
      %v1434 = vpop.f32.mrf.mxu0
      %v1435 = vadd.f32 %v1286, %v1434
      %v1436 = vand.u32 %v297, 4294901760
      %1437 = vmatmul.f32.gmra.mxu0 %v1436
      %v1438 = vpop.f32.mrf.mxu0
      %v1439 = vadd.f32 %v1290, %v1438
      %v1440 = vand.u32 %v300, 4294901760
      %1441 = vmatmul.f32.gmra.mxu0 %v1440
      %v1442 = vpop.f32.mrf.mxu0
      %v1443 = vadd.f32 %v1294, %v1442
      %v1444 = vand.u32 %v303, 4294901760
      %1445 = vmatmul.f32.gmra.mxu0 %v1444
      %v1446 = vpop.f32.mrf.mxu0
      %v1447 = vadd.f32 %v1298, %v1446
      %v1448 = vand.u32 %v306, 4294901760
      %1449 = vmatmul.f32.gmra.mxu0 %v1448
      %v1450 = vpop.f32.mrf.mxu0
      %v1451 = vadd.f32 %v1302, %v1450
      %v1452 = vand.u32 %v309, 4294901760
      %1453 = vmatmul.f32.gmra.mxu0 %v1452
      %v1454 = vpop.f32.mrf.mxu0
      %v1455 = vadd.f32 %v1306, %v1454
      %1456 = vdwg.mxu0
      %vm1457 = vcmask 80896
      %1458 = vst.msk [vmem:[%s172] sm:$0xff] %vm1457, %v1331
      %1459 = vst.msk [vmem:[%s172 + $0x8] sm:$0xff] %vm1457, %v1335
      %1460 = vst.msk [vmem:[%s172 + $0x10] sm:$0xff] %vm1457, %v1339
      %1461 = vst.msk [vmem:[%s172 + $0x18] sm:$0xff] %vm1457, %v1343
      %1462 = vst.msk [vmem:[%s172 + $0x20] sm:$0xff] %vm1457, %v1347
      %1463 = vst.msk [vmem:[%s172 + $0x28] sm:$0xff] %vm1457, %v1351
      %1464 = vst.msk [vmem:[%s172 + $0x30] sm:$0xff] %vm1457, %v1355
      %1465 = vst.msk [vmem:[%s172 + $0x38] sm:$0xff] %vm1457, %v1359
      %1466 = vst.msk [vmem:[%s172 + $0x40] sm:$0xff] %vm1457, %v1363
      %1467 = vst.msk [vmem:[%s172 + $0x48] sm:$0xff] %vm1457, %v1367
      %1468 = vst.msk [vmem:[%s172 + $0x50] sm:$0xff] %vm1457, %v1371
      %1469 = vst.msk [vmem:[%s172 + $0x58] sm:$0xff] %vm1457, %v1375
      %1470 = vst.msk [vmem:[%s172 + $0x60] sm:$0xff] %vm1457, %v1379
      %1471 = vst.msk [vmem:[%s172 + $0x68] sm:$0xff] %vm1457, %v1383
      %1472 = vst.msk [vmem:[%s172 + $0x70] sm:$0xff] %vm1457, %v1387
      %1473 = vst.msk [vmem:[%s172 + $0x78] sm:$0xff] %vm1457, %v1391
      %1474 = vst.msk [vmem:[%s172 + $0x80] sm:$0xff] %vm1457, %v1395
      %1475 = vst.msk [vmem:[%s172 + $0x88] sm:$0xff] %vm1457, %v1399
      %1476 = vst.msk [vmem:[%s172 + $0x90] sm:$0xff] %vm1457, %v1403
      %1477 = vst.msk [vmem:[%s172 + $0x98] sm:$0xff] %vm1457, %v1407
      %1478 = vst.msk [vmem:[%s172 + $0xa0] sm:$0xff] %vm1457, %v1411
      %1479 = vst.msk [vmem:[%s172 + $0xa8] sm:$0xff] %vm1457, %v1415
      %1480 = vst.msk [vmem:[%s172 + $0xb0] sm:$0xff] %vm1457, %v1419
      %1481 = vst.msk [vmem:[%s172 + $0xb8] sm:$0xff] %vm1457, %v1423
      %1482 = vst.msk [vmem:[%s172 + $0xc0] sm:$0xff] %vm1457, %v1427
      %1483 = vst.msk [vmem:[%s172 + $0xc8] sm:$0xff] %vm1457, %v1431
      %1484 = vst.msk [vmem:[%s172 + $0xd0] sm:$0xff] %vm1457, %v1435
      %1485 = vst.msk [vmem:[%s172 + $0xd8] sm:$0xff] %vm1457, %v1439
      %1486 = vst.msk [vmem:[%s172 + $0xe0] sm:$0xff] %vm1457, %v1443
      %1487 = vst.msk [vmem:[%s172 + $0xe8] sm:$0xff] %vm1457, %v1447
      %1488 = vst.msk [vmem:[%s172 + $0xf0] sm:$0xff] %vm1457, %v1451
      %1489 = vst.msk [vmem:[%s172 + $0xf8] sm:$0xff] %vm1457, %v1455
      %s1490 = smul.u32 32, %s14
      %p1491 = scmp.lt.s32.totalorder %s1490, 63
      %s1492 = scalar_select %p1491, %s1490, 63
      %s1493 = smul.addr %s1492, 8
      %s1494 = scalar_lea.vmem %s3, %s1493
      // Predicated region
      $region33: #{lr_model_forward.1} parent=31 // pred_check
        %p1495 = pneg %p100
      $region34: #{lr_model_forward.1} parent=31 // pred_check_branch
        %1497 = sbr.rel (%p1495) target = $region36
      $region35: #{lr_model_forward.1} parent=31 // pred_region
        %s1498 = smul.u32 32, %s14
      $region36: #{lr_model_forward.1} parent=31 // pred_fallthru
        _
    $region32: #{lr_model_forward.1} parent=5 // pred_fallthru
      _
    %p1499 = scmp.le.s32.totalorder 2, %s9
    // Predicated region
    $region37: #{lr_model_forward.1} parent=5 // pred_check
      %p1500 = pneg %p1499
    $region38: #{lr_model_forward.1} parent=5 // pred_check_branch
      %1502 = sbr.rel (%p1500) target = $region40
    $region39: #{lr_model_forward.1} parent=5 // pred_region
      %s1503 = ssub.s32 %s9, 2
      // Predicated region
      $region41: #{lr_model_forward.1} parent=39 // pred_check
        %p1504 = pneg %p106
      $region42: #{lr_model_forward.1} parent=39 // pred_check_branch
        %1506 = sbr.rel (%p1504) target = $region44
      $region43: #{lr_model_forward.1} parent=39 // pred_region
        %s1507 = smul.u32 32, %s15
        %p1508 = scmp.lt.s32.totalorder %s1507, 63
        %s1509 = scalar_select %p1508, %s1507, 63
        %s1510 = smul.addr %s1509, 8
        %s1511 = scalar_lea.vmem %s3, %s1510
      $region44: #{lr_model_forward.1} parent=39 // pred_fallthru
        _
    $region40: #{lr_model_forward.1} parent=5 // pred_fallthru
      _
  $region6: #{lr_model_forward.1} parent=0 // loop_footer
    %s13 = sadd.s32 1, %s9
  $region7: #{lr_model_forward.1} parent=0 // loop_footer_branch
    %8 = sbr.rel target = $region3
  $region8: #{lr_model_forward.1} parent=0 // loop_exit
    _

</llo_original>
